<compile_context>
chip_gen: v6e
topology: v6e:2x2x1
jax: 0.10.0
libtpu: 0.0.40
codegen_flags: <defaults>
</compile_context>

<pallas_src>
import jax
import jax.numpy as jnp
from jax.experimental import pallas as pl
from jax.experimental.pallas import tpu as pltpu


def affine_sigmoid_kernel(x_ref, w_ref, b_ref, o_ref):
    """x_ref: (TILE_B, T) VMEM; w_ref: (1, T) VMEM; b_ref: (1,) SMEM;
    o_ref: (TILE_B, 1) VMEM."""
    # Row-wise dot product: VPU multiply + XLU cross-lane reduce (no MXU).
    z = jnp.sum(x_ref[...] * w_ref[...], axis=-1, keepdims=True) + b_ref[0]
    # sigmoid(z) = 1 / (1 + exp(-z)): exp + approx reciprocal both on the EUP.
    o_ref[...] = pl.reciprocal(1.0 + jnp.exp(-z), approx=True).astype(o_ref.dtype)


def _collapse_params(params):
    """Fold the three unactivated Linear layers into one affine map."""
    w1, b1 = params["w1"], params["b1"]
    w2, b2 = params["w2"], params["b2"]
    w3, b3 = params["w3"], params["b3"]
    w = w1 @ w2 @ w3                      # (T, 1)
    b = (b1 @ w2 + b2) @ w3 + b3          # (1, 1)
    return w.T, b.reshape(1)              # (1, T) lane-dense row, (1,) scalar


def quality_model_1_layer_forward(x, params, *, tile_b=256):
    """x: (B, T) float32. params: dict of w1,b1,w2,b2,w3,b3 in (in, out) layout."""
    B, T = x.shape
    w_row, b_scalar = _collapse_params(params)

    # Batch tiling: TILE_B rows (multiple of 256 for v6e/v7x MXU-free VPU tiles,
    # also a multiple of 128/8) per grid step; single sublane-aligned block if
    # the batch is small.
    if B <= tile_b:
        tile_b = max(8, ((B + 7) // 8) * 8)
    b_pad = pl.cdiv(B, tile_b) * tile_b
    if b_pad != B:
        x = jnp.pad(x, ((0, b_pad - B), (0, 0)))

    out = pl.pallas_call(
        affine_sigmoid_kernel,
        out_shape=jax.ShapeDtypeStruct((b_pad, 1), jnp.float32),
        grid=(b_pad // tile_b,),
        in_specs=[
            pl.BlockSpec((tile_b, T), lambda i: (i, 0)),        # x batch tile
            pl.BlockSpec((1, T), lambda i: (0, 0)),             # resident W row
            pl.BlockSpec(memory_space=pltpu.MemorySpace.SMEM),  # scalar bias
        ],
        out_specs=pl.BlockSpec((tile_b, 1), lambda i: (i, 0)),
        compiler_params=pltpu.CompilerParams(
            dimension_semantics=("parallel",)),   # batch axis -> both TCs on v7x
    )(x, w_row, b_scalar)
    return out[:B]


def init_params(key, tensor_length):
    """Deterministic init mirroring torch.nn.Linear shapes.
    PyTorch stores weight as (out, in); we keep (in, out) for the kernel."""
    d0 = tensor_length
    d1 = tensor_length // 2
    d2 = tensor_length // 4
    ks = jax.random.split(key, 6)

    def uniform(k, shape, fan_in):
        bound = 1.0 / jnp.sqrt(fan_in)
        return jax.random.uniform(k, shape, jnp.float32, -bound, bound)

    return {
        "w1": uniform(ks[0], (d0, d1), d0),
        "b1": uniform(ks[1], (1, d1), d0),
        "w2": uniform(ks[2], (d1, d2), d1),
        "b2": uniform(ks[3], (1, d2), d1),
        "w3": uniform(ks[4], (d2, 1), d2),
        "b3": uniform(ks[5], (1, 1), d2),
    }


def reference_forward(x, p):
    """Uncollapsed 3-matmul reference (mirrors the PyTorch forward exactly)."""
    h1 = x @ p["w1"] + p["b1"]
    h2 = h1 @ p["w2"] + p["b2"]
    h3 = h2 @ p["w3"] + p["b3"]
    return jax.nn.sigmoid(h3)


if __name__ == "__main__":
    # base_context_count=3, extra_count=3 -> tensor_length = 5**3 + 3 = 128
    base_context_count, extra_count = 3, 3
    tensor_length = 5 ** base_context_count + extra_count  # 128

    key = jax.random.PRNGKey(0)
    kx, kp = jax.random.split(key)
    B = 8
    x = jax.random.normal(kx, (B, tensor_length), dtype=jnp.float32)
    params = init_params(kp, tensor_length)

    out = quality_model_1_layer_forward(x, params)
    out = jax.block_until_ready(out)

    ref = reference_forward(x, params)
    assert out.shape == (B, 1), out.shape
    # Tolerance covers fp reassociation of the collapsed weights and the EUP
    # approximate reciprocal (outputs are in (0, 1)).
    assert jnp.allclose(out, ref, atol=2e-3, rtol=2e-3), "mismatch vs reference"
    print("KERNEL_OK")
</pallas_src>

<mosaic_0001>
module attributes {stable_mosaic.version = 11 : i64} {
  func.func @affine_sigmoid_kernel(%arg0: i32, %arg1: memref<8x128xf32, #tpu.memory_space<vmem>>, %arg2: memref<1x128xf32, #tpu.memory_space<vmem>>, %arg3: memref<1xf32, #tpu.memory_space<smem>>, %arg4: memref<8x1xf32, #tpu.memory_space<vmem>>) attributes {dimension_semantics = [#tpu.dimension_semantics<parallel>], iteration_bounds = array<i64: 1>, scalar_prefetch = 0 : i64, scratch_operands = 0 : i64, tpu.core_type = #tpu.core_type<tc>, window_params = [{transform_indices = @transform_0, window_bounds = array<i64: 8, 128>}, {pipeline_mode = #tpu.pipeline_mode<synchronous>, transform_indices = @transform_1, window_bounds = array<i64: 1, 128>}, {transform_indices = @transform_2, window_bounds = array<i64: 1>}, {transform_indices = @transform_3, window_bounds = array<i64: 8, 1>}]} {
    %c0 = arith.constant 0 : index
    %c0_0 = arith.constant 0 : index
    %0 = vector.load %arg1[%c0, %c0_0] : memref<8x128xf32, #tpu.memory_space<vmem>>, vector<8x128xf32>
    %c0_1 = arith.constant 0 : index
    %c0_2 = arith.constant 0 : index
    %1 = vector.load %arg2[%c0_1, %c0_2] : memref<1x128xf32, #tpu.memory_space<vmem>>, vector<1x128xf32>
    %2 = vector.broadcast %1 : vector<1x128xf32> to vector<8x128xf32>
    %3 = arith.mulf %0, %2 : vector<8x128xf32>
    %cst = arith.constant dense<0.000000e+00> : vector<8xf32>
    %4 = vector.multi_reduction <add>, %3, %cst [1] : vector<8x128xf32> to vector<8xf32>
    %5 = vector.shape_cast %4 : vector<8xf32> to vector<8x1xf32>
    %c0_3 = arith.constant 0 : index
    %6 = memref.load %arg3[%c0_3] : memref<1xf32, #tpu.memory_space<smem>>
    %7 = vector.broadcast %6 : f32 to vector<8x1xf32>
    %8 = arith.addf %5, %7 : vector<8x1xf32>
    %cst_4 = arith.constant 0.000000e+00 : f32
    %9 = vector.broadcast %cst_4 : f32 to vector<8x1xf32>
    %10 = arith.subf %9, %8 : vector<8x1xf32>
    %11 = math.exp %10 : vector<8x1xf32>
    %cst_5 = arith.constant 1.000000e+00 : f32
    %12 = vector.broadcast %cst_5 : f32 to vector<8x1xf32>
    %13 = arith.addf %12, %11 : vector<8x1xf32>
    %14 = tpu.reciprocal %13 {approx = true} : vector<8x1xf32> -> vector<8x1xf32>
    %c0_6 = arith.constant 0 : index
    %c0_7 = arith.constant 0 : index
    %15 = vector.load %arg4[%c0_6, %c0_7] : memref<8x1xf32, #tpu.memory_space<vmem>>, vector<8x1xf32>
    tpu.vector_store %arg4[%c0_6, %c0_7], %14 {strides = array<i32>} : memref<8x1xf32, #tpu.memory_space<vmem>>, vector<8x1xf32>,
    return
  }
  func.func @transform_0(%arg0: i32) -> (i32, i32) {
    %c0_i32 = arith.constant 0 : i32
    %c0_i32_0 = arith.constant 0 : i32
    return %arg0, %c0_i32 : i32, i32
  }
  func.func @transform_1(%arg0: i32) -> (i32, i32) {
    %c0_i32 = arith.constant 0 : i32
    %c0_i32_0 = arith.constant 0 : i32
    %c0_i32_1 = arith.constant 0 : i32
    return %c0_i32, %c0_i32_0 : i32, i32
  }
  func.func @transform_2(%arg0: i32) -> i32 {
    %c0_i32 = arith.constant 0 : i32
    %c0_i32_0 = arith.constant 0 : i32
    return %c0_i32 : i32
  }
  func.func @transform_3(%arg0: i32) -> (i32, i32) {
    %c0_i32 = arith.constant 0 : i32
    %c0_i32_0 = arith.constant 0 : i32
    return %arg0, %c0_i32 : i32, i32
  }
}

</mosaic_0001>

<llo_original>
// kernel: tpu_custom_call.1
$region0: #{tpu_custom_call.1}
  #allocation0 [shape = 'u32[]', space=smem, size = 0x4, offset = 0x4, fixed_abs, tag = 'smem constant byte address 0x4 - core index']
  #allocation1 [shape = 'u32[144,128]{1,0:T(1,128)}', space=vmem, size = 0x12000, scoped, tag = 'internal scratch']
  #allocation2 [shape = 'f32[1]{0:T(128)S(6)}', space=smem, size = 0x200, scoped, tag = 'scoped memory for tpu_custom_call.1']
  %s0 = inlined_call_operand.hbm [shape: f32[8,128], index: 0, kind: input, shape index: {}]
  %s1 = inlined_call_operand.vmem [shape: f32[1,128], index: 1, kind: input, shape index: {}]
  %s2 = inlined_call_operand.<no memory space> [shape: f32[1], index: 2, kind: input, shape index: {}]
  %s3 = inlined_call_operand.vmem [shape: f32[8,1], index: 3, kind: output, shape index: {}]
  %s4 = sld [smem:[#allocation0]]
  $region26: #{tpu_custom_call.1} parent=0
    _
  %s6 = ssub.s32 1, %s4
  %s7 = scalar_select 0, %s6, %s4
  %8 = sst [smem:[#allocation2]] %s2
  $region1: #{tpu_custom_call.1} parent=0
    #allocation3 [shape = 'u8[4096]{0}', space=vmem, size = 0x1000, scoped, tag = 'input window, operand 0, single buffered']
    #allocation4 [shape = 's32[1]{0}', space=sflag, size = 0x4, scoped, tag = 'scoped memory for tpu_custom_call.1']
    %9 = vsyncpa [#allocation4], 0
    // Predicated region
    $region2: #{tpu_custom_call.1} parent=1 // pred_check
      _
    $region3: #{tpu_custom_call.1} parent=1 // pred_check_branch
      %11 = sbr.rel (0) target = $region5
    $region4: #{tpu_custom_call.1} parent=1 // pred_region
      %s13 = ssub.s32 128, 128
      %14 = vsyncadd [#allocation4], %s13
      %s16 = sshll.u32 [#allocation3], 4
      %s17 = int_to_ptr.vmem [resolvable:$true] %s16
      %19 = dma.hbm_to_vmem [thread:$0]  %s0, 128, %s17, [#allocation4]
    $region5: #{tpu_custom_call.1} parent=1 // pred_fallthru
      _
    // Predicated region
    $region6: #{tpu_custom_call.1} parent=1 // pred_check
      _
    $region7: #{tpu_custom_call.1} parent=1 // pred_check_branch
      %21 = sbr.rel (0) target = $region9
    $region8: #{tpu_custom_call.1} parent=1 // pred_region
      _
    $region9: #{tpu_custom_call.1} parent=1 // pred_fallthru
      _
    // Predicated region
    $region10: #{tpu_custom_call.1} parent=1 // pred_check
      _
    $region11: #{tpu_custom_call.1} parent=1 // pred_check_branch
      %23 = sbr.rel (0) target = $region13
    $region12: #{tpu_custom_call.1} parent=1 // pred_region
      _
    $region13: #{tpu_custom_call.1} parent=1 // pred_fallthru
      _
    // Predicated region
    $region14: #{tpu_custom_call.1} parent=1 // pred_check
      _
    $region15: #{tpu_custom_call.1} parent=1 // pred_check_branch
      %25 = sbr.rel (0) target = $region17
    $region16: #{tpu_custom_call.1} parent=1 // pred_region
      %26 = dma.done [#allocation4], 128
    $region17: #{tpu_custom_call.1} parent=1 // pred_fallthru
      _
    %v27 = vld [vmem:[#allocation3] sm:$0xff]
    %v28 = vld [vmem:[%s1] sm:$0x1]
    %v30 = vlaneseq
    %v31 = vshrl.u32 %v30, 7
    %v32 = vsub.s32 0, %v31
    %v33 = vrot.slane %v28, %v32
    %v35 = vmul.f32 %v27, %v33
    %36 = vadd.xlane.f32.xlu0 %v35
    %v37 = vpop.xlane.xlu0 %36
    %s38 = sld [smem:[#allocation2]]
    %v39 = vstv %s38
    %v40 = vadd.f32 %v37, %v39
    %v41 = vsub.f32 0.0, %v40
    %v42 = vmul.f32 %v41, 1.442695
    %v43 = vpow.pop %v42
    %v44 = vadd.f32 %v43, 1.0
    %v45 = vrcp.pop %v44
    %vm46 = vcmask 7168
    %47 = vst.msk [vmem:[%s3] sm:$0xff] %vm46, %v45
    // Predicated region
    $region18: #{tpu_custom_call.1} parent=1 // pred_check
      _
    $region19: #{tpu_custom_call.1} parent=1 // pred_check_branch
      %49 = sbr.rel (0) target = $region21
    $region20: #{tpu_custom_call.1} parent=1 // pred_region
      _
    $region21: #{tpu_custom_call.1} parent=1 // pred_fallthru
      _
    // Predicated region
    $region22: #{tpu_custom_call.1} parent=1 // pred_check
      _
    $region23: #{tpu_custom_call.1} parent=1 // pred_check_branch
      %51 = sbr.rel (0) target = $region25
    $region24: #{tpu_custom_call.1} parent=1 // pred_region
      _
    $region25: #{tpu_custom_call.1} parent=1 // pred_fallthru
      _
    %52 = vsyncpa [#allocation4], 1

</llo_original>
